<compile_context>
chip_gen: v7x
topology: tpu7x:2x2x1
jax: 0.10.0
libtpu: 0.0.40
codegen_flags: <defaults>
</compile_context>

<pallas_src>
import functools

import jax
import jax.numpy as jnp
from jax.experimental import pallas as pl
from jax.experimental.pallas import tpu as pltpu

EPS = 1e-5
NEG_INF = -1e9


# --------------------------- small helpers ---------------------------------
def _layer_norm_f32(x, g, b):
    # x: (R, D) f32, g/b: (1, D) f32. Statistics kept in f32.
    mu = jnp.mean(x, axis=-1, keepdims=True)
    var = jnp.mean((x - mu) ** 2, axis=-1, keepdims=True)
    return (x - mu) * jax.lax.rsqrt(var + EPS) * g + b


def _physical_vmem_bytes():
    try:
        info = pltpu.get_tpu_info()
        return int(getattr(info, "vmem_capacity_bytes", 64 << 20))
    except Exception:
        return 64 << 20  # conservative: v7x per-TC VMEM


def _vmem_limit(need_bytes):
    # Leave ~25% headroom for compiler scratch / output double-buffering
    # (matters most on v7x's 64 MiB; allows ~96 MiB on v5e/v6e's 128 MiB).
    cap = (_physical_vmem_bytes() * 3) // 4
    return int(min(max(int(need_bytes), 32 << 20), cap))


def _tile_cap():
    # v5e/v6e (128 MiB VMEM) can afford 256-row tiles; v7x (64 MiB) stays at 128.
    return 256 if _physical_vmem_bytes() >= (96 << 20) else 128


def _pick_tile(S, cap):
    if S % 8 == 0:
        for t in range(min(S, cap), 7, -1):
            if S % t == 0 and t % 8 == 0:
                return t
    # TODO(synk): pad ragged S instead of falling back to a full-sequence tile.
    return S


def _const_spec(shape, single_buffer=False):
    nd = len(shape)

    def idx(*_):  # constant block regardless of grid position / arity
        return (0,) * nd

    if single_buffer:
        # block never changes across the grid -> single-buffer (halves VMEM).
        return pl.BlockSpec(shape, idx, pipeline_mode=pl.Buffered(1))
    return pl.BlockSpec(shape, idx)


# --------------------------- kernel A: LN + K/V projection ------------------
def kv_proj_kernel(x_ref, g1_ref, b1_ref, wk_ref, bk_ref, wv_ref, bv_ref,
                   k_ref, v_ref, *, num_heads):
    """LayerNorm + K/V projection for one (batch, seq-tile) step.

    Runs ONCE per layer over the whole sequence (no per-query-tile recompute).
    Outputs are head-major bf16: (1, H, TS, dk).
    """
    f32, bf16 = jnp.float32, jnp.bfloat16
    x = x_ref[0]                                   # (TS, D) f32
    TS, D = x.shape
    H = num_heads

    xn = _layer_norm_f32(x, g1_ref[...], b1_ref[...]).astype(bf16)
    # Head-major projections via a single batched dot_general per tensor
    # (weights pre-split on the host to (H, D, dk)); no lane slicing / stacking.
    xnb = jnp.broadcast_to(xn, (H, TS, D))
    k = jnp.einsum('htd,hdf->htf', xnb, wk_ref[...],
                   preferred_element_type=f32) + bk_ref[...]
    v = jnp.einsum('htd,hdf->htf', xnb, wv_ref[...],
                   preferred_element_type=f32) + bv_ref[...]
    k_ref[0] = k.astype(bf16)
    v_ref[0] = v.astype(bf16)


def _kv_cost(B, S, D, H):
    flops = B * S * 4 * D * D
    bytes_accessed = (B * S * D * 4            # x read (f32)
                      + 2 * B * S * D * 2      # K,V written (bf16)
                      + 2 * D * D * 2          # weights (bf16)
                      + 8 * D * 4)
    return pl.CostEstimate(flops=int(flops), transcendentals=int(B * S),
                           bytes_accessed=int(bytes_accessed))


def _kv_vmem_need(TS, D, H):
    dk = D // H
    w = 2 * (H * D * dk) * 2                              # wk+wv bf16, single-buffered
    io = 2 * TS * D * 4 + 2 * 2 * (H * TS * dk) * 2       # x in (2-buf), K/V out (2-buf)
    tmp = (H * TS * D) * 2 + (H * TS * dk) * 8 + 6 * TS * D * 4
    return w + io + tmp + (4 << 20)


def make_kv_proj_call(B, S, D, H, TS):
    dk = D // H
    ns = S // TS
    W = functools.partial(_const_spec, single_buffer=True)
    P = _const_spec
    return pl.pallas_call(
        functools.partial(kv_proj_kernel, num_heads=H),
        out_shape=(jax.ShapeDtypeStruct((B, H, S, dk), jnp.bfloat16),
                   jax.ShapeDtypeStruct((B, H, S, dk), jnp.bfloat16)),
        grid=(B, ns),
        in_specs=[
            pl.BlockSpec((1, TS, D), lambda b, si: (b, si, 0)),   # x tile
            P((1, D)), P((1, D)),                                 # ln1 gamma / beta
            W((H, D, dk)), P((H, 1, dk)),                         # Wk (heads), bk
            W((H, D, dk)), P((H, 1, dk)),                         # Wv (heads), bv
        ],
        out_specs=(pl.BlockSpec((1, H, TS, dk), lambda b, si: (b, 0, si, 0)),
                   pl.BlockSpec((1, H, TS, dk), lambda b, si: (b, 0, si, 0))),
        compiler_params=pltpu.CompilerParams(
            dimension_semantics=("parallel", "parallel"),
            vmem_limit_bytes=_vmem_limit(_kv_vmem_need(TS, D, H))),
        cost_estimate=_kv_cost(B, S, D, H),
    )


# ------------- kernel B: flash attention + residual + FFN (+ final LN) ------
def attn_ffn_kernel(xq_ref, mask_ref, k_ref, v_ref,
                    g1_ref, b1_ref, wq_ref, bq_ref, wo_ref, bo_ref,
                    g2_ref, b2_ref, w1_ref, bf1_ref, w2_ref, bf2_ref,
                    gf_ref, bfin_ref,
                    o_ref,
                    qh_scr, m_scr, l_scr, acc_scr, cat_scr,
                    *, num_heads, apply_final_norm, scale):
    """One (batch, query-tile, key-tile) grid step.

    Grid = (B, nq, nk); the key axis is 'arbitrary' and carries an online
    softmax in persistent VMEM scratch.  On the last key tile the attention is
    finalized and fused with the residual, the FFN sublayer and (optionally)
    the encoder's final LayerNorm.
    """
    f32, bf16 = jnp.float32, jnp.bfloat16
    H = num_heads
    ki = pl.program_id(2)
    nk = pl.num_programs(2)

    # ---- first key tile: project Q (head-major) and reset the accumulators ---
    @pl.when(ki == 0)
    def _init():
        xq = xq_ref[0]                             # (TQ, D) f32
        TQ, D = xq.shape
        xn = _layer_norm_f32(xq, g1_ref[...], b1_ref[...]).astype(bf16)
        xnb = jnp.broadcast_to(xn, (H, TQ, D))
        q = jnp.einsum('htd,hdf->htf', xnb, wq_ref[...],
                       preferred_element_type=f32) + bq_ref[...]
        qh_scr[...] = (q * scale).astype(bf16)     # 1/sqrt(dk) folded into Q
        m_scr[...] = jnp.full(m_scr.shape, -jnp.inf, dtype=f32)
        l_scr[...] = jnp.zeros(l_scr.shape, dtype=f32)
        acc_scr[...] = jnp.zeros(acc_scr.shape, dtype=f32)

    # ---- online-softmax update over this key tile ---------------------------
    kb = k_ref[0]                                  # (H, TK, dk) bf16
    vb = v_ref[0]                                  # (H, TK, dk) bf16
    bias = jnp.where(mask_ref[0] > 0, 0.0, NEG_INF)         # (1, TK) f32

    s = jnp.einsum('hqd,hkd->hqk', qh_scr[...], kb,
                   preferred_element_type=f32) + bias        # (H, TQ, TK)
    m_new = jnp.maximum(m_scr[...], jnp.max(s, axis=-1, keepdims=True))
    alpha = jnp.exp(m_scr[...] - m_new)
    p = jnp.exp(s - m_new)                                   # f32 exp (see TODO)
    l_scr[...] = alpha * l_scr[...] + jnp.sum(p, axis=-1, keepdims=True)
    acc_scr[...] = alpha * acc_scr[...] + jnp.einsum(
        'hqk,hkd->hqd', p.astype(bf16), vb, preferred_element_type=f32)
    m_scr[...] = m_new

    # ---- last key tile: finalize attention, residual, FFN, (final LN) -------
    @pl.when(ki == nk - 1)
    def _finalize():
        xq = xq_ref[0]                             # (TQ, D) f32
        dk = acc_scr.shape[-1]
        ctx = (acc_scr[...] * pl.reciprocal(l_scr[...], approx=True)).astype(bf16)
        # Merge heads back onto the lane axis ONCE per query tile (small scratch
        # writes), then one full-width (D-contraction) MXU matmul with the
        # original (D, D) Wo performs the cross-head reduction on the MXU —
        # no (H, TQ, D) f32 intermediate, no VPU head-sum.
        for h in range(H):
            cat_scr[:, h * dk:(h + 1) * dk] = ctx[h]
        attn = jnp.dot(cat_scr[...], wo_ref[...],
                       preferred_element_type=f32) + bo_ref[...]
        x = xq + attn                              # dropout = identity (eval)

        xn2 = _layer_norm_f32(x, g2_ref[...], b2_ref[...]).astype(bf16)
        hdn = jnp.maximum(
            jnp.dot(xn2, w1_ref[...], preferred_element_type=f32) + bf1_ref[...],
            0.0)
        ff = jnp.dot(hdn.astype(bf16), w2_ref[...],
                     preferred_element_type=f32) + bf2_ref[...]
        x = x + ff

        if apply_final_norm:
            x = _layer_norm_f32(x, gf_ref[...], bfin_ref[...])
        o_ref[0] = x


def _attn_cost(B, S, D, d_ff, H, TQ, TK):
    nq = S // TQ
    nk = S // TK
    flops = B * (4 * S * D * D + 4 * S * S * D + 4 * S * D * d_ff)
    transcendentals = B * (H * S * S + H * S * nk + 8 * S)
    bytes_accessed = (2 * B * S * D * 4            # x in + out (f32)
                      + 2 * B * nq * S * D * 2     # K + V read per query row (bf16)
                      + B * S * 4                  # mask
                      + (2 * D * D + 2 * D * d_ff) * 2
                      + (12 * D + d_ff) * 4)
    return pl.CostEstimate(flops=int(flops), transcendentals=int(transcendentals),
                           bytes_accessed=int(bytes_accessed))


def _attn_vmem_need(TQ, TK, D, d_ff, H):
    dk = D // H
    w = (2 * D * D + 2 * D * d_ff) * 2                       # bf16 weights, 1-buffered
    io = 2 * (TQ * D * 4) * 2 + 2 * 2 * (H * TK * dk) * 2    # xq+out (2-buf), K/V (2-buf)
    scr = (2 + 4 + 2) * TQ * D + 2 * H * TQ * 4
    tmp = 3 * H * TQ * TK * 4 + 6 * TQ * d_ff + (H * TQ * D) * 2 + 8 * TQ * D * 4
    return w + io + scr + tmp + (4 << 20)


def make_attn_ffn_call(B, S, D, d_ff, H, TQ, TK, apply_final_norm):
    dk = D // H
    nq, nk = S // TQ, S // TK
    scale = 1.0 / float(dk) ** 0.5
    W = functools.partial(_const_spec, single_buffer=True)
    P = _const_spec
    in_specs = [
        pl.BlockSpec((1, TQ, D), lambda b, qi, ki: (b, qi, 0)),        # x (query tile)
        pl.BlockSpec((1, 1, TK), lambda b, qi, ki: (b, 0, ki)),        # mask (key tile)
        pl.BlockSpec((1, H, TK, dk), lambda b, qi, ki: (b, 0, ki, 0)),  # K tile
        pl.BlockSpec((1, H, TK, dk), lambda b, qi, ki: (b, 0, ki, 0)),  # V tile
        P((1, D)), P((1, D)),                                           # ln1 gamma/beta
        W((H, D, dk)), P((H, 1, dk)),                                   # Wq (heads), bq
        W((D, D)), P((1, D)),                                           # Wo (full), bo
        P((1, D)), P((1, D)),                                           # ln2 gamma/beta
        W((D, d_ff)), P((1, d_ff)),                                     # W1, b1
        W((d_ff, D)), P((1, D)),                                        # W2, b2
        P((1, D)), P((1, D)),                                           # final-LN gamma/beta
    ]
    scratch_shapes = [
        pltpu.VMEM((H, TQ, dk), jnp.bfloat16),   # Q (head-major, scaled)
        pltpu.VMEM((H, TQ, 1), jnp.float32),     # online-softmax max
        pltpu.VMEM((H, TQ, 1), jnp.float32),     # online-softmax denom
        pltpu.VMEM((H, TQ, dk), jnp.float32),    # context accumulator
        pltpu.VMEM((TQ, D), jnp.bfloat16),       # heads merged back to lanes
    ]
    return pl.pallas_call(
        functools.partial(attn_ffn_kernel, num_heads=H,
                          apply_final_norm=apply_final_norm, scale=scale),
        out_shape=jax.ShapeDtypeStruct((B, S, D), jnp.float32),
        grid=(B, nq, nk),
        in_specs=in_specs,
        out_specs=pl.BlockSpec((1, TQ, D), lambda b, qi, ki: (b, qi, 0)),
        scratch_shapes=scratch_shapes,
        compiler_params=pltpu.CompilerParams(
            # B and the query axis stay parallel (megacore on v7x); only the
            # key/online-softmax axis is sequential.
            dimension_semantics=("parallel", "parallel", "arbitrary"),
            vmem_limit_bytes=_vmem_limit(_attn_vmem_need(TQ, TK, D, d_ff, H))),
        cost_estimate=_attn_cost(B, S, D, d_ff, H, TQ, TK),
    )


# --------------------------- host-side parameter prep -----------------------
def prepare_layer_params(layer_params, num_heads):
    """One-time prep: cast weights to bf16 and pre-split Q/K/V per head."""
    bf16 = jnp.bfloat16
    prepared = []
    for (g1, b1, wq, bq, wk, bk, wv, bv, wo, bo,
         g2, b2, w1, bf1_, w2, bf2_) in layer_params:
        D = wq.shape[0]
        dk = D // num_heads

        def split_w(w):   # (D, D) -> (H, D, dk); head h reads lanes [h*dk, (h+1)*dk)
            return jnp.transpose(w.reshape(D, num_heads, dk), (1, 0, 2)).astype(bf16)

        def split_b(b):   # (1, D) -> (H, 1, dk)
            return jnp.transpose(b.reshape(1, num_heads, dk), (1, 0, 2))

        prepared.append((g1, b1,
                         split_w(wq), split_b(bq),
                         split_w(wk), split_b(bk),
                         split_w(wv), split_b(bv),
                         wo.astype(bf16), bo,
                         g2, b2,
                         w1.astype(bf16), bf1_,
                         w2.astype(bf16), bf2_))
    return prepared


def encoder_pallas(x, mask, prepared_layers, gf, bfin, num_heads):
    B, S, D = x.shape
    assert D % num_heads == 0
    d_ff = prepared_layers[0][12].shape[1]
    T = _pick_tile(S, _tile_cap())       # used for query, key and kv-proj tiles
    n_layers = len(prepared_layers)

    kv_call = make_kv_proj_call(B, S, D, num_heads, T)
    mid_call = make_attn_ffn_call(B, S, D, d_ff, num_heads, T, T,
                                  apply_final_norm=False)
    last_call = make_attn_ffn_call(B, S, D, d_ff, num_heads, T, T,
                                   apply_final_norm=True)

    for li, p in enumerate(prepared_layers):
        (g1, b1, wq_h, bq_h, wk_h, bk_h, wv_h, bv_h, wo_b, bo,
         g2, b2, w1_b, b1f, w2_b, b2f) = p
        # K/V computed once per layer (head-major bf16), then streamed in tiles.
        k_h, v_h = kv_call(x, g1, b1, wk_h, bk_h, wv_h, bv_h)
        call = last_call if li == n_layers - 1 else mid_call
        x = call(x, mask, k_h, v_h,
                 g1, b1, wq_h, bq_h, wo_b, bo,
                 g2, b2, w1_b, b1f, w2_b, b2f,
                 gf, bfin)
    return x


# --------------------------- parameter init ---------------------------------
def init_params(key, num_layers, D, d_ff):
    params = []
    for _ in range(num_layers):
        key, *ks = jax.random.split(key, 7)
        g1 = jnp.ones((1, D), jnp.float32)
        b1 = jnp.zeros((1, D), jnp.float32)
        wq = 0.1 * jax.random.normal(ks[0], (D, D), jnp.float32)
        wk = 0.1 * jax.random.normal(ks[1], (D, D), jnp.float32)
        wv = 0.1 * jax.random.normal(ks[2], (D, D), jnp.float32)
        wo = 0.1 * jax.random.normal(ks[3], (D, D), jnp.float32)
        bq = jnp.zeros((1, D), jnp.float32)
        bk = jnp.zeros((1, D), jnp.float32)
        bv = jnp.zeros((1, D), jnp.float32)
        bo = jnp.zeros((1, D), jnp.float32)
        g2 = jnp.ones((1, D), jnp.float32)
        b2 = jnp.zeros((1, D), jnp.float32)
        w1 = 0.1 * jax.random.normal(ks[4], (D, d_ff), jnp.float32)
        bf1 = jnp.zeros((1, d_ff), jnp.float32)
        w2 = 0.1 * jax.random.normal(ks[5], (d_ff, D), jnp.float32)
        bf2 = jnp.zeros((1, D), jnp.float32)
        params.append((g1, b1, wq, bq, wk, bk, wv, bv, wo, bo,
                       g2, b2, w1, bf1, w2, bf2))
    gf = jnp.ones((1, D), jnp.float32)
    bf = jnp.zeros((1, D), jnp.float32)
    return params, gf, bf


# ------------------------- pure-JAX reference ------------------------------
# Mirrors the kernel's mixed precision (bf16 matmul operands, f32 accumulation,
# f32 LayerNorm / softmax / residuals) so the allclose check is tight.
def _ln_ref(x, g, b):
    mu = x.mean(-1, keepdims=True)
    var = ((x - mu) ** 2).mean(-1, keepdims=True)
    return (x - mu) * jax.lax.rsqrt(var + EPS) * g + b


def encoder_ref(x, mask, layer_params, gf, bfin, num_heads):
    B, S, D = x.shape
    H = num_heads
    dk = D // H
    scale = 1.0 / (dk ** 0.5)
    f32, bf16 = jnp.float32, jnp.bfloat16
    bias = jnp.where(mask > 0, 0.0, NEG_INF)[:, :, None, :]          # (B,1,1,S)
    for (g1, b1, wq, bq, wk, bk, wv, bv, wo, bo,
         g2, b2, w1, bf1_, w2, bf2_) in layer_params:
        xn = _ln_ref(x, g1, b1).astype(bf16)
        q = (jnp.dot(xn, wq.astype(bf16), preferred_element_type=f32) + bq) * scale
        k = jnp.dot(xn, wk.astype(bf16), preferred_element_type=f32) + bk
        v = jnp.dot(xn, wv.astype(bf16), preferred_element_type=f32) + bv
        qh = q.reshape(B, S, H, dk).astype(bf16)
        kh = k.reshape(B, S, H, dk).astype(bf16)
        vh = v.reshape(B, S, H, dk).astype(bf16)
        s = jnp.einsum('bqhd,bkhd->bhqk', qh, kh, preferred_element_type=f32) + bias
        s = s - s.max(-1, keepdims=True)
        p = jnp.exp(s)
        p = p / p.sum(-1, keepdims=True)
        ctx = jnp.einsum('bhqk,bkhd->bqhd', p.astype(bf16), vh,
                         preferred_element_type=f32).reshape(B, S, D)
        attn = jnp.dot(ctx.astype(bf16), wo.astype(bf16),
                       preferred_element_type=f32) + bo
        x = x + attn
        xn2 = _ln_ref(x, g2, b2).astype(bf16)
        hdn = jnp.maximum(
            jnp.dot(xn2, w1.astype(bf16), preferred_element_type=f32) + bf1_, 0.0)
        x = x + jnp.dot(hdn.astype(bf16), w2.astype(bf16),
                        preferred_element_type=f32) + bf2_
    return _ln_ref(x, gf, bfin)


if __name__ == "__main__":
    B, S, D, H, DFF, L = 2, 8, 32, 4, 64, 2

    key = jax.random.PRNGKey(0)
    kx, kp = jax.random.split(key)
    x = jax.random.normal(kx, (B, S, D), jnp.float32)

    # key-padding mask: (B, 1, S); batch 1 has its last two positions masked out.
    mask = jnp.ones((B, 1, S), jnp.float32)
    mask = mask.at[1, 0, S - 2:].set(0.0)

    layer_params, gf, bfin = init_params(kp, L, D, DFF)
    prepared = prepare_layer_params(layer_params, H)    # one-time bf16 cast / head split

    out = encoder_pallas(x, mask, prepared, gf, bfin, H)
    out = jax.block_until_ready(out)

    ref = encoder_ref(x, mask, layer_params, gf, bfin, H)
    assert out.shape == (B, S, D)
    err = jnp.max(jnp.abs(out - ref))
    assert jnp.allclose(out, ref, atol=2e-2, rtol=2e-2), f"max abs err {err}"

    print("KERNEL_OK")
</pallas_src>

<mosaic_0001>
module attributes {stable_mosaic.version = 11 : i64} {
  func.func @kv_proj_kernel(%arg0: i32, %arg1: i32, %arg2: memref<1x8x32xf32, #tpu.memory_space<vmem>>, %arg3: memref<1x32xf32, #tpu.memory_space<vmem>>, %arg4: memref<1x32xf32, #tpu.memory_space<vmem>>, %arg5: memref<4x32x8xbf16, #tpu.memory_space<vmem>>, %arg6: memref<4x1x8xf32, #tpu.memory_space<vmem>>, %arg7: memref<4x32x8xbf16, #tpu.memory_space<vmem>>, %arg8: memref<4x1x8xf32, #tpu.memory_space<vmem>>, %arg9: memref<1x4x8x8xbf16, #tpu.memory_space<vmem>>, %arg10: memref<1x4x8x8xbf16, #tpu.memory_space<vmem>>) attributes {dimension_semantics = [#tpu.dimension_semantics<parallel>, #tpu.dimension_semantics<parallel>], iteration_bounds = array<i64: 2, 1>, scalar_prefetch = 0 : i64, scratch_operands = 0 : i64, tpu.core_type = #tpu.core_type<tc>, window_params = [{transform_indices = @transform_0, window_bounds = array<i64: 1, 8, 32>}, {pipeline_mode = #tpu.pipeline_mode<synchronous>, transform_indices = @transform_1, window_bounds = array<i64: 1, 32>}, {pipeline_mode = #tpu.pipeline_mode<synchronous>, transform_indices = @transform_2, window_bounds = array<i64: 1, 32>}, {pipeline_mode = #tpu.pipeline_mode<synchronous>, transform_indices = @transform_3, window_bounds = array<i64: 4, 32, 8>}, {pipeline_mode = #tpu.pipeline_mode<synchronous>, transform_indices = @transform_4, window_bounds = array<i64: 4, 1, 8>}, {pipeline_mode = #tpu.pipeline_mode<synchronous>, transform_indices = @transform_5, window_bounds = array<i64: 4, 32, 8>}, {pipeline_mode = #tpu.pipeline_mode<synchronous>, transform_indices = @transform_6, window_bounds = array<i64: 4, 1, 8>}, {transform_indices = @transform_7, window_bounds = array<i64: 1, 4, 8, 8>}, {transform_indices = @transform_8, window_bounds = array<i64: 1, 4, 8, 8>}]} {
    %c0 = arith.constant 0 : index
    %c0_0 = arith.constant 0 : index
    %c0_1 = arith.constant 0 : index
    %0 = vector.load %arg2[%c0, %c0_0, %c0_1] : memref<1x8x32xf32, #tpu.memory_space<vmem>>, vector<1x8x32xf32>
    %1 = vector.shape_cast %0 : vector<1x8x32xf32> to vector<8x32xf32>
    %c0_2 = arith.constant 0 : index
    %c0_3 = arith.constant 0 : index
    %2 = vector.load %arg3[%c0_2, %c0_3] : memref<1x32xf32, #tpu.memory_space<vmem>>, vector<1x32xf32>
    %c0_4 = arith.constant 0 : index
    %c0_5 = arith.constant 0 : index
    %3 = vector.load %arg4[%c0_4, %c0_5] : memref<1x32xf32, #tpu.memory_space<vmem>>, vector<1x32xf32>
    %cst = arith.constant dense<0.000000e+00> : vector<8xf32>
    %4 = vector.multi_reduction <add>, %1, %cst [1] : vector<8x32xf32> to vector<8xf32>
    %5 = vector.shape_cast %4 : vector<8xf32> to vector<8x1xf32>
    %cst_6 = arith.constant 3.200000e+01 : f32
    %6 = vector.broadcast %cst_6 : f32 to vector<8x1xf32>
    %7 = arith.divf %5, %6 : vector<8x1xf32>
    %8 = vector.broadcast %7 : vector<8x1xf32> to vector<8x32xf32>
    %9 = arith.subf %1, %8 : vector<8x32xf32>
    %10 = arith.mulf %9, %9 : vector<8x32xf32>
    %cst_7 = arith.constant dense<0.000000e+00> : vector<8xf32>
    %11 = vector.multi_reduction <add>, %10, %cst_7 [1] : vector<8x32xf32> to vector<8xf32>
    %12 = vector.shape_cast %11 : vector<8xf32> to vector<8x1xf32>
    %cst_8 = arith.constant 3.200000e+01 : f32
    %13 = vector.broadcast %cst_8 : f32 to vector<8x1xf32>
    %14 = arith.divf %12, %13 : vector<8x1xf32>
    %15 = vector.broadcast %7 : vector<8x1xf32> to vector<8x32xf32>
    %16 = arith.subf %1, %15 : vector<8x32xf32>
    %cst_9 = arith.constant 9.99999974E-6 : f32
    %17 = vector.broadcast %cst_9 : f32 to vector<8x1xf32>
    %18 = arith.addf %14, %17 : vector<8x1xf32>
    %19 = math.rsqrt %18 : vector<8x1xf32>
    %20 = vector.broadcast %19 : vector<8x1xf32> to vector<8x32xf32>
    %21 = arith.mulf %16, %20 : vector<8x32xf32>
    %22 = vector.broadcast %2 : vector<1x32xf32> to vector<8x32xf32>
    %23 = arith.mulf %21, %22 : vector<8x32xf32>
    %24 = vector.broadcast %3 : vector<1x32xf32> to vector<8x32xf32>
    %25 = arith.addf %23, %24 : vector<8x32xf32>
    %26 = arith.truncf %25 : vector<8x32xf32> to vector<8x32xbf16>
    %27 = vector.shape_cast %26 : vector<8x32xbf16> to vector<1x8x32xbf16>
    %28 = vector.broadcast %27 : vector<1x8x32xbf16> to vector<4x8x32xbf16>
    %c0_10 = arith.constant 0 : index
    %c0_11 = arith.constant 0 : index
    %c0_12 = arith.constant 0 : index
    %29 = vector.load %arg5[%c0_10, %c0_11, %c0_12] : memref<4x32x8xbf16, #tpu.memory_space<vmem>>, vector<4x32x8xbf16>
    "tpu.trace_start"() <{level = 10 : i32, message = "htd,hdf->htf"}> : () -> ()
    %cst_13 = arith.constant dense<0.000000e+00> : vector<4x8x8xf32>
    %30 = tpu.matmul %28, %29, %cst_13 {dimension_numbers = #tpu.dot_dimension_numbers<[2], [1], [1], [2], [0, 0, 0, 1, 1, 2], [0], [0]>} : vector<4x8x32xbf16>, vector<4x32x8xbf16>, vector<4x8x8xf32> -> vector<4x8x8xf32>
    "tpu.trace_stop"() : () -> ()
    %c0_14 = arith.constant 0 : index
    %c0_15 = arith.constant 0 : index
    %c0_16 = arith.constant 0 : index
    %31 = vector.load %arg6[%c0_14, %c0_15, %c0_16] : memref<4x1x8xf32, #tpu.memory_space<vmem>>, vector<4x1x8xf32>
    %32 = vector.broadcast %31 : vector<4x1x8xf32> to vector<4x8x8xf32>
    %33 = arith.addf %30, %32 : vector<4x8x8xf32>
    %c0_17 = arith.constant 0 : index
    %c0_18 = arith.constant 0 : index
    %c0_19 = arith.constant 0 : index
    %34 = vector.load %arg7[%c0_17, %c0_18, %c0_19] : memref<4x32x8xbf16, #tpu.memory_space<vmem>>, vector<4x32x8xbf16>
    "tpu.trace_start"() <{level = 10 : i32, message = "htd,hdf->htf"}> : () -> ()
    %cst_20 = arith.constant dense<0.000000e+00> : vector<4x8x8xf32>
    %35 = tpu.matmul %28, %34, %cst_20 {dimension_numbers = #tpu.dot_dimension_numbers<[2], [1], [1], [2], [0, 0, 0, 1, 1, 2], [0], [0]>} : vector<4x8x32xbf16>, vector<4x32x8xbf16>, vector<4x8x8xf32> -> vector<4x8x8xf32>
    "tpu.trace_stop"() : () -> ()
    %c0_21 = arith.constant 0 : index
    %c0_22 = arith.constant 0 : index
    %c0_23 = arith.constant 0 : index
    %36 = vector.load %arg8[%c0_21, %c0_22, %c0_23] : memref<4x1x8xf32, #tpu.memory_space<vmem>>, vector<4x1x8xf32>
    %37 = vector.broadcast %36 : vector<4x1x8xf32> to vector<4x8x8xf32>
    %38 = arith.addf %35, %37 : vector<4x8x8xf32>
    %39 = arith.truncf %33 : vector<4x8x8xf32> to vector<4x8x8xbf16>
    %c0_24 = arith.constant 0 : index
    %c0_25 = arith.constant 0 : index
    %c0_26 = arith.constant 0 : index
    %c0_27 = arith.constant 0 : index
    %40 = vector.load %arg9[%c0_24, %c0_25, %c0_26, %c0_27] : memref<1x4x8x8xbf16, #tpu.memory_space<vmem>>, vector<1x4x8x8xbf16>
    %41 = vector.shape_cast %40 : vector<1x4x8x8xbf16> to vector<4x8x8xbf16>
    %42 = vector.shape_cast %39 : vector<4x8x8xbf16> to vector<1x4x8x8xbf16>
    tpu.vector_store %arg9[%c0_24, %c0_25, %c0_26, %c0_27], %42 {strides = array<i32>} : memref<1x4x8x8xbf16, #tpu.memory_space<vmem>>, vector<1x4x8x8xbf16>,
    %43 = arith.truncf %38 : vector<4x8x8xf32> to vector<4x8x8xbf16>
    %c0_28 = arith.constant 0 : index
    %c0_29 = arith.constant 0 : index
    %c0_30 = arith.constant 0 : index
    %c0_31 = arith.constant 0 : index
    %44 = vector.load %arg10[%c0_28, %c0_29, %c0_30, %c0_31] : memref<1x4x8x8xbf16, #tpu.memory_space<vmem>>, vector<1x4x8x8xbf16>
    %45 = vector.shape_cast %44 : vector<1x4x8x8xbf16> to vector<4x8x8xbf16>
    %46 = vector.shape_cast %43 : vector<4x8x8xbf16> to vector<1x4x8x8xbf16>
    tpu.vector_store %arg10[%c0_28, %c0_29, %c0_30, %c0_31], %46 {strides = array<i32>} : memref<1x4x8x8xbf16, #tpu.memory_space<vmem>>, vector<1x4x8x8xbf16>,
    return
  }
  func.func @transform_0(%arg0: i32, %arg1: i32) -> (i32, i32, i32) {
    %c0_i32 = arith.constant 0 : i32
    %c0_i32_0 = arith.constant 0 : i32
    return %arg0, %arg1, %c0_i32 : i32, i32, i32
  }
  func.func @transform_1(%arg0: i32, %arg1: i32) -> (i32, i32) {
    %c0_i32 = arith.constant 0 : i32
    %c0_i32_0 = arith.constant 0 : i32
    %c0_i32_1 = arith.constant 0 : i32
    return %c0_i32, %c0_i32_0 : i32, i32
  }
  func.func @transform_2(%arg0: i32, %arg1: i32) -> (i32, i32) {
    %c0_i32 = arith.constant 0 : i32
    %c0_i32_0 = arith.constant 0 : i32
    %c0_i32_1 = arith.constant 0 : i32
    return %c0_i32, %c0_i32_0 : i32, i32
  }
  func.func @transform_3(%arg0: i32, %arg1: i32) -> (i32, i32, i32) {
    %c0_i32 = arith.constant 0 : i32
    %c0_i32_0 = arith.constant 0 : i32
    %c0_i32_1 = arith.constant 0 : i32
    %c0_i32_2 = arith.constant 0 : i32
    return %c0_i32, %c0_i32_0, %c0_i32_1 : i32, i32, i32
  }
  func.func @transform_4(%arg0: i32, %arg1: i32) -> (i32, i32, i32) {
    %c0_i32 = arith.constant 0 : i32
    %c0_i32_0 = arith.constant 0 : i32
    %c0_i32_1 = arith.constant 0 : i32
    %c0_i32_2 = arith.constant 0 : i32
    return %c0_i32, %c0_i32_0, %c0_i32_1 : i32, i32, i32
  }
  func.func @transform_5(%arg0: i32, %arg1: i32) -> (i32, i32, i32) {
    %c0_i32 = arith.constant 0 : i32
    %c0_i32_0 = arith.constant 0 : i32
    %c0_i32_1 = arith.constant 0 : i32
    %c0_i32_2 = arith.constant 0 : i32
    return %c0_i32, %c0_i32_0, %c0_i32_1 : i32, i32, i32
  }
  func.func @transform_6(%arg0: i32, %arg1: i32) -> (i32, i32, i32) {
    %c0_i32 = arith.constant 0 : i32
    %c0_i32_0 = arith.constant 0 : i32
    %c0_i32_1 = arith.constant 0 : i32
    %c0_i32_2 = arith.constant 0 : i32
    return %c0_i32, %c0_i32_0, %c0_i32_1 : i32, i32, i32
  }
  func.func @transform_7(%arg0: i32, %arg1: i32) -> (i32, i32, i32, i32) {
    %c0_i32 = arith.constant 0 : i32
    %c0_i32_0 = arith.constant 0 : i32
    %c0_i32_1 = arith.constant 0 : i32
    return %arg0, %c0_i32, %arg1, %c0_i32_0 : i32, i32, i32, i32
  }
  func.func @transform_8(%arg0: i32, %arg1: i32) -> (i32, i32, i32, i32) {
    %c0_i32 = arith.constant 0 : i32
    %c0_i32_0 = arith.constant 0 : i32
    %c0_i32_1 = arith.constant 0 : i32
    return %arg0, %c0_i32, %arg1, %c0_i32_0 : i32, i32, i32, i32
  }
}

</mosaic_0001>

<llo_original>
// kernel: tpu_custom_call.1
$region0: #{tpu_custom_call.1}
  #allocation0 [shape = 'u32[]', space=smem, size = 0x4, offset = 0x4, fixed_abs, tag = 'smem constant byte address 0x4 - core index']
  #allocation1 [shape = 'u32[144,128]{1,0:T(1,128)}', space=vmem, size = 0x12000, scoped, tag = 'internal scratch']
  %s0 = inlined_call_operand.vmem [shape: f32[2,8,32], index: 0, kind: input, shape index: {}]
  %s1 = inlined_call_operand.vmem [shape: f32[1,32], index: 1, kind: input, shape index: {}]
  %s2 = inlined_call_operand.vmem [shape: f32[1,32], index: 2, kind: input, shape index: {}]
  %s3 = inlined_call_operand.vmem [shape: bf16[4,32,8], index: 3, kind: input, shape index: {}]
  %s4 = inlined_call_operand.vmem [shape: f32[4,1,8], index: 4, kind: input, shape index: {}]
  %s5 = inlined_call_operand.vmem [shape: bf16[4,32,8], index: 5, kind: input, shape index: {}]
  %s6 = inlined_call_operand.vmem [shape: f32[4,1,8], index: 6, kind: input, shape index: {}]
  %s7 = inlined_call_operand.hbm [shape: bf16[2,4,8,8], index: 7, kind: output, shape index: {0}]
  %s8 = inlined_call_operand.hbm [shape: bf16[2,4,8,8], index: 8, kind: output, shape index: {1}]
  %9 = xla_tuple %s7, %s8
  %s10 = sld [smem:[#allocation0]]
  $region69: #{tpu_custom_call.1} parent=0
    _
  %s12 = ssub.s32 1, %s10
  %s13 = scalar_select 0, %s12, %s10
  $region1: #{tpu_custom_call.1} parent=0
    #allocation2 [shape = 'u8[16384]{0}', space=vmem, size = 0x4000, scoped, tag = 'output window, operand 0']
    #allocation3 [shape = 's32[2]{0}', space=sflag, size = 0x8, scoped, tag = 'scoped memory for tpu_custom_call.1']
    #allocation4 [shape = 'u8[16384]{0}', space=vmem, size = 0x4000, scoped, tag = 'output window, operand 1']
    #allocation5 [shape = 's32[2]{0}', space=sflag, size = 0x8, scoped, tag = 'scoped memory for tpu_custom_call.1']
    %14 = vsyncpa [#allocation3], 0
    %s15 = scalar_lea.sflag [#allocation3], 1
    %16 = vsyncpa %s15, 0
    %17 = vsyncpa [#allocation5], 0
    %s18 = scalar_lea.sflag [#allocation5], 1
    %19 = vsyncpa %s18, 0
    loop: start=0, step=1, limit=4
    $region2: #{tpu_custom_call.1} parent=1 // loop_pre_header
      _
    $region3: #{tpu_custom_call.1} parent=1 // loop_header
      %s21 = sphi 0, %s25
      %p22 = scmp.ge.s32.totalorder %s21, 4
      %s28 = sphi 0, %s40
      %s29 = sphi 0, %s36
      %s30 = sphi 0, %s28
      %s31 = sphi 0, %s29
      %s32 = sphi 0, %s30
      %s33 = sphi 0, %s31
      %s45 = sphi 0, %s47
      %s48 = sphi 0, %s45
      %s49 = sphi 0, %s48
      %s65 = sphi 0, %s49
      %s69 = sphi 0, %s69
      %s71 = sphi 0, %s69
      %s72 = sphi 0, %s71
      %s86 = sphi 0, %s72
      %s90 = sphi 0, %s90
      %s92 = sphi 0, %s90
      %s93 = sphi 0, %s92
      %s107 = sphi 0, %s93
      %s111 = sphi 0, %s111
      %s113 = sphi 0, %s111
      %s114 = sphi 0, %s113
      %s128 = sphi 0, %s114
      %s132 = sphi 0, %s132
      %s134 = sphi 0, %s132
      %s135 = sphi 0, %s134
      %s149 = sphi 0, %s135
      %s153 = sphi 0, %s153
      %s155 = sphi 0, %s153
      %s156 = sphi 0, %s155
      %s170 = sphi 0, %s156
      %s174 = sphi 0, %s174
      %s176 = sphi 0, %s174
      %s177 = sphi 0, %s176
      %s191 = sphi 0, %s177
      %s199 = sphi 0, %s201
      %s202 = sphi 0, %s199
      %s203 = sphi 0, %s202
      %s219 = sphi 0, %s203
      %s227 = sphi 0, %s229
      %s230 = sphi 0, %s227
      %s231 = sphi 0, %s230
      %s247 = sphi 0, %s231
    $region4: #{tpu_custom_call.1} parent=1 // loop_header_branch
      %24 = sbr.rel (%p22) target = $region8
    $region5: #{tpu_custom_call.1} parent=1 // loop_body
      %s26 = ssub.s32 %s21, 1
      %s27 = ssub.s32 %s21, 2
      %s34 = sadd.s32 1, %s29
      %p35 = scmp.ge.s32.totalorder %s34, 1
      %s36 = scalar_select %p35, 0, %s34
      %s37 = sadd.s32 1, %s28
      %s38 = scalar_select %p35, %s37, %s28
      %p39 = scmp.ge.s32.totalorder %s38, 2
      %s40 = scalar_select %p39, 0, %s38
      %s41 = ssub.s32 %s28, %s40
      %s42 = ssub.s32 %s29, %s36
      %s43 = sor.u32 %s41, %s42
      %p44 = scmp.eq.s32.totalorder %s43, 0
      %s46 = sadd.s32 %s45, 1
      %s47 = scalar_select %p44, %s45, %s46
      %p50 = pneg %p44
      %p51 = scmp.eq.s32.totalorder %s21, 1
      %p52 = por %p50, %p51
      %p53 = scmp.ne.s32.totalorder %s45, %s48
      %p54 = scmp.eq.s32.totalorder %s21, 0
      %p55 = por %p53, %p54
      %p56 = scmp.ne.s32.totalorder %s45, %s48
      %p57 = scmp.eq.s32.totalorder %s26, 1
      %p58 = por %p56, %p57
      %p59 = scmp.ne.s32.totalorder %s48, %s49
      %p60 = scmp.eq.s32.totalorder %s26, 0
      %p61 = por %p59, %p60
      %p62 = scmp.ne.s32.totalorder %s48, %s49
      %p63 = scmp.eq.s32.totalorder %s27, 1
      %p64 = por %p62, %p63
      %p66 = scmp.ne.s32.totalorder %s49, %s65
      %p67 = scmp.eq.s32.totalorder %s27, 0
      %p68 = por %p66, %p67
      %s70 = sadd.s32 %s69, 1
      %p73 = scmp.eq.s32.totalorder %s21, 1
      %p74 = scmp.ne.s32.totalorder %s69, %s71
      %p75 = scmp.eq.s32.totalorder %s21, 0
      %p76 = por %p74, %p75
      %p77 = scmp.ne.s32.totalorder %s69, %s71
      %p78 = scmp.eq.s32.totalorder %s26, 1
      %p79 = por %p77, %p78
      %p80 = scmp.ne.s32.totalorder %s71, %s72
      %p81 = scmp.eq.s32.totalorder %s26, 0
      %p82 = por %p80, %p81
      %p83 = scmp.ne.s32.totalorder %s71, %s72
      %p84 = scmp.eq.s32.totalorder %s27, 1
      %p85 = por %p83, %p84
      %p87 = scmp.ne.s32.totalorder %s72, %s86
      %p88 = scmp.eq.s32.totalorder %s27, 0
      %p89 = por %p87, %p88
      %s91 = sadd.s32 %s90, 1
      %p94 = scmp.eq.s32.totalorder %s21, 1
      %p95 = scmp.ne.s32.totalorder %s90, %s92
      %p96 = scmp.eq.s32.totalorder %s21, 0
      %p97 = por %p95, %p96
      %p98 = scmp.ne.s32.totalorder %s90, %s92
      %p99 = scmp.eq.s32.totalorder %s26, 1
      %p100 = por %p98, %p99
      %p101 = scmp.ne.s32.totalorder %s92, %s93
      %p102 = scmp.eq.s32.totalorder %s26, 0
      %p103 = por %p101, %p102
      %p104 = scmp.ne.s32.totalorder %s92, %s93
      %p105 = scmp.eq.s32.totalorder %s27, 1
      %p106 = por %p104, %p105
      %p108 = scmp.ne.s32.totalorder %s93, %s107
      %p109 = scmp.eq.s32.totalorder %s27, 0
      %p110 = por %p108, %p109
      %s112 = sadd.s32 %s111, 1
      %p115 = scmp.eq.s32.totalorder %s21, 1
      %p116 = scmp.ne.s32.totalorder %s111, %s113
      %p117 = scmp.eq.s32.totalorder %s21, 0
      %p118 = por %p116, %p117
      %p119 = scmp.ne.s32.totalorder %s111, %s113
      %p120 = scmp.eq.s32.totalorder %s26, 1
      %p121 = por %p119, %p120
      %p122 = scmp.ne.s32.totalorder %s113, %s114
      %p123 = scmp.eq.s32.totalorder %s26, 0
      %p124 = por %p122, %p123
      %p125 = scmp.ne.s32.totalorder %s113, %s114
      %p126 = scmp.eq.s32.totalorder %s27, 1
      %p127 = por %p125, %p126
      %p129 = scmp.ne.s32.totalorder %s114, %s128
      %p130 = scmp.eq.s32.totalorder %s27, 0
      %p131 = por %p129, %p130
      %s133 = sadd.s32 %s132, 1
      %p136 = scmp.eq.s32.totalorder %s21, 1
      %p137 = scmp.ne.s32.totalorder %s132, %s134
      %p138 = scmp.eq.s32.totalorder %s21, 0
      %p139 = por %p137, %p138
      %p140 = scmp.ne.s32.totalorder %s132, %s134
      %p141 = scmp.eq.s32.totalorder %s26, 1
      %p142 = por %p140, %p141
      %p143 = scmp.ne.s32.totalorder %s134, %s135
      %p144 = scmp.eq.s32.totalorder %s26, 0
      %p145 = por %p143, %p144
      %p146 = scmp.ne.s32.totalorder %s134, %s135
      %p147 = scmp.eq.s32.totalorder %s27, 1
      %p148 = por %p146, %p147
      %p150 = scmp.ne.s32.totalorder %s135, %s149
      %p151 = scmp.eq.s32.totalorder %s27, 0
      %p152 = por %p150, %p151
      %s154 = sadd.s32 %s153, 1
      %p157 = scmp.eq.s32.totalorder %s21, 1
      %p158 = scmp.ne.s32.totalorder %s153, %s155
      %p159 = scmp.eq.s32.totalorder %s21, 0
      %p160 = por %p158, %p159
      %p161 = scmp.ne.s32.totalorder %s153, %s155
      %p162 = scmp.eq.s32.totalorder %s26, 1
      %p163 = por %p161, %p162
      %p164 = scmp.ne.s32.totalorder %s155, %s156
      %p165 = scmp.eq.s32.totalorder %s26, 0
      %p166 = por %p164, %p165
      %p167 = scmp.ne.s32.totalorder %s155, %s156
      %p168 = scmp.eq.s32.totalorder %s27, 1
      %p169 = por %p167, %p168
      %p171 = scmp.ne.s32.totalorder %s156, %s170
      %p172 = scmp.eq.s32.totalorder %s27, 0
      %p173 = por %p171, %p172
      %s175 = sadd.s32 %s174, 1
      %p178 = scmp.eq.s32.totalorder %s21, 1
      %p179 = scmp.ne.s32.totalorder %s174, %s176
      %p180 = scmp.eq.s32.totalorder %s21, 0
      %p181 = por %p179, %p180
      %p182 = scmp.ne.s32.totalorder %s174, %s176
      %p183 = scmp.eq.s32.totalorder %s26, 1
      %p184 = por %p182, %p183
      %p185 = scmp.ne.s32.totalorder %s176, %s177
      %p186 = scmp.eq.s32.totalorder %s26, 0
      %p187 = por %p185, %p186
      %p188 = scmp.ne.s32.totalorder %s176, %s177
      %p189 = scmp.eq.s32.totalorder %s27, 1
      %p190 = por %p188, %p189
      %p192 = scmp.ne.s32.totalorder %s177, %s191
      %p193 = scmp.eq.s32.totalorder %s27, 0
      %p194 = por %p192, %p193
      %s195 = ssub.s32 %s28, %s40
      %s196 = ssub.s32 %s29, %s36
      %s197 = sor.u32 %s195, %s196
      %p198 = scmp.eq.s32.totalorder %s197, 0
      %s200 = sadd.s32 %s199, 1
      %s201 = scalar_select %p198, %s199, %s200
      %p204 = pneg %p198
      %p205 = scmp.eq.s32.totalorder %s21, 1
      %p206 = por %p204, %p205
      %p207 = scmp.ne.s32.totalorder %s199, %s202
      %p208 = scmp.eq.s32.totalorder %s21, 0
      %p209 = por %p207, %p208
      %p210 = scmp.ne.s32.totalorder %s199, %s202
      %p211 = scmp.eq.s32.totalorder %s26, 1
      %p212 = por %p210, %p211
      %p213 = scmp.ne.s32.totalorder %s202, %s203
      %p214 = scmp.eq.s32.totalorder %s26, 0
      %p215 = por %p213, %p214
      %p216 = scmp.ne.s32.totalorder %s202, %s203
      %p217 = scmp.eq.s32.totalorder %s27, 1
      %p218 = por %p216, %p217
      %p220 = scmp.ne.s32.totalorder %s203, %s219
      %p221 = scmp.eq.s32.totalorder %s27, 0
      %p222 = por %p220, %p221
      %s223 = ssub.s32 %s28, %s40
      %s224 = ssub.s32 %s29, %s36
      %s225 = sor.u32 %s223, %s224
      %p226 = scmp.eq.s32.totalorder %s225, 0
      %s228 = sadd.s32 %s227, 1
      %s229 = scalar_select %p226, %s227, %s228
      %p232 = pneg %p226
      %p233 = scmp.eq.s32.totalorder %s21, 1
      %p234 = por %p232, %p233
      %p235 = scmp.ne.s32.totalorder %s227, %s230
      %p236 = scmp.eq.s32.totalorder %s21, 0
      %p237 = por %p235, %p236
      %p238 = scmp.ne.s32.totalorder %s227, %s230
      %p239 = scmp.eq.s32.totalorder %s26, 1
      %p240 = por %p238, %p239
      %p241 = scmp.ne.s32.totalorder %s230, %s231
      %p242 = scmp.eq.s32.totalorder %s26, 0
      %p243 = por %p241, %p242
      %p244 = scmp.ne.s32.totalorder %s230, %s231
      %p245 = scmp.eq.s32.totalorder %s27, 1
      %p246 = por %p244, %p245
      %p248 = scmp.ne.s32.totalorder %s231, %s247
      %p249 = scmp.eq.s32.totalorder %s27, 0
      %p250 = por %p248, %p249
      %p251 = scmp.le.s32.totalorder 1, %s21
      %p252 = scmp.lt.s32.totalorder %s21, 3
      %p253 = pnand %p251, %p252
      %p254 = pneg %p253
      // Predicated region
      $region9: #{tpu_custom_call.1} parent=5 // pred_check
        _
      $region10: #{tpu_custom_call.1} parent=5 // pred_check_branch
        %256 = sbr.rel (%p253) target = $region12
      $region11: #{tpu_custom_call.1} parent=5 // pred_region
        %s257 = ssub.s32 %s21, 1
        // Predicated region
        $region13: #{tpu_custom_call.1} parent=11 // pred_check
          %p258 = pneg %p82
        $region14: #{tpu_custom_call.1} parent=11 // pred_check_branch
          %260 = sbr.rel (%p258) target = $region16
        $region15: #{tpu_custom_call.1} parent=11 // pred_region
          _
        $region16: #{tpu_custom_call.1} parent=11 // pred_fallthru
          _
        // Predicated region
        $region17: #{tpu_custom_call.1} parent=11 // pred_check
          %p261 = pneg %p103
        $region18: #{tpu_custom_call.1} parent=11 // pred_check_branch
          %263 = sbr.rel (%p261) target = $region20
        $region19: #{tpu_custom_call.1} parent=11 // pred_region
          _
        $region20: #{tpu_custom_call.1} parent=11 // pred_fallthru
          _
        // Predicated region
        $region21: #{tpu_custom_call.1} parent=11 // pred_check
          %p264 = pneg %p124
        $region22: #{tpu_custom_call.1} parent=11 // pred_check_branch
          %266 = sbr.rel (%p264) target = $region24
        $region23: #{tpu_custom_call.1} parent=11 // pred_region
          _
        $region24: #{tpu_custom_call.1} parent=11 // pred_fallthru
          _
        // Predicated region
        $region25: #{tpu_custom_call.1} parent=11 // pred_check
          %p267 = pneg %p145
        $region26: #{tpu_custom_call.1} parent=11 // pred_check_branch
          %269 = sbr.rel (%p267) target = $region28
        $region27: #{tpu_custom_call.1} parent=11 // pred_region
          _
        $region28: #{tpu_custom_call.1} parent=11 // pred_fallthru
          _
        // Predicated region
        $region29: #{tpu_custom_call.1} parent=11 // pred_check
          %p270 = pneg %p166
        $region30: #{tpu_custom_call.1} parent=11 // pred_check_branch
          %272 = sbr.rel (%p270) target = $region32
        $region31: #{tpu_custom_call.1} parent=11 // pred_region
          _
        $region32: #{tpu_custom_call.1} parent=11 // pred_fallthru
          _
        // Predicated region
        $region33: #{tpu_custom_call.1} parent=11 // pred_check
          %p273 = pneg %p187
        $region34: #{tpu_custom_call.1} parent=11 // pred_check_branch
          %275 = sbr.rel (%p273) target = $region36
        $region35: #{tpu_custom_call.1} parent=11 // pred_region
          _
        $region36: #{tpu_custom_call.1} parent=11 // pred_fallthru
          _
      $region12: #{tpu_custom_call.1} parent=5 // pred_fallthru
        _
      %p276 = scmp.lt.s32.totalorder %s21, 2
      // Predicated region
      $region37: #{tpu_custom_call.1} parent=5 // pred_check
        %p277 = pneg %p276
      $region38: #{tpu_custom_call.1} parent=5 // pred_check_branch
        %279 = sbr.rel (%p277) target = $region40
      $region39: #{tpu_custom_call.1} parent=5 // pred_region
        // Predicated region
        $region41: #{tpu_custom_call.1} parent=39 // pred_check
          %p280 = pneg %p55
        $region42: #{tpu_custom_call.1} parent=39 // pred_check_branch
          %282 = sbr.rel (%p280) target = $region44
        $region43: #{tpu_custom_call.1} parent=39 // pred_region
          %p283 = scmp.lt.s32.totalorder %s28, 1
          %s284 = scalar_select %p283, %s28, 1
          %p285 = scmp.lt.s32.totalorder %s29, 0
          %s286 = scalar_select %p285, %s29, 0
          %s287 = sadd.s32 %s286, %s284
          %s288 = smul.addr %s287, 8
          %s289 = scalar_lea.vmem %s0, %s288
        $region44: #{tpu_custom_call.1} parent=39 // pred_fallthru
          _
      $region40: #{tpu_custom_call.1} parent=5 // pred_fallthru
        _
      %p290 = scmp.le.s32.totalorder 1, %s21
      %p291 = scmp.lt.s32.totalorder %s21, 3
      %p292 = pnand %p290, %p291
      %p293 = pneg %p292
      // Predicated region
      $region45: #{tpu_custom_call.1} parent=5 // pred_check
        _
      $region46: #{tpu_custom_call.1} parent=5 // pred_check_branch
        %295 = sbr.rel (%p292) target = $region48
      $region47: #{tpu_custom_call.1} parent=5 // pred_region
        %s296 = ssub.s32 %s21, 1
        %p297 = scmp.lt.s32.totalorder %s30, 1
        %s298 = scalar_select %p297, %s30, 1
        %p299 = scmp.lt.s32.totalorder %s31, 0
        %s300 = scalar_select %p299, %s31, 0
        %s301 = sadd.s32 %s300, %s298
        %s302 = smul.addr %s301, 8
        %s303 = scalar_lea.vmem %s0, %s302
        %p304 = pneg %p61
        %p305 = pneg %p58
        %p306 = pneg %p82
        %p307 = pneg %p79
        %p308 = pneg %p103
        %p309 = pneg %p100
        %p310 = pneg %p124
        %p311 = pneg %p121
        %p312 = pneg %p145
        %p313 = pneg %p142
        %p314 = pneg %p166
        %p315 = pneg %p163
        %p316 = pneg %p187
        %p317 = pneg %p184
        %p318 = pneg %p215
        %p319 = pneg %p212
        %s320 = sand.u32 %s202, 1
        %s321 = scalar_lea.sflag [#allocation3], %s320
        %s322 = sand.u32 %s202, 1
        %s323 = smul.addr %s322, 16
        %s324 = scalar_lea.vmem [#allocation2], %s323
        %p325 = pneg %p243
        %p326 = pneg %p240
        %s327 = sand.u32 %s230, 1
        %s328 = scalar_lea.sflag [#allocation5], %s327
        %s329 = sand.u32 %s230, 1
        %s330 = smul.addr %s329, 16
        %s331 = scalar_lea.vmem [#allocation4], %s330
        %p332 = scmp.lt.s32.totalorder %s30, 1
        %s333 = scalar_select %p332, %s30, 1
        %p334 = scmp.lt.s32.totalorder %s31, 0
        %s335 = scalar_select %p334, %s31, 0
        %s336 = sadd.s32 %s335, %s333
        %s337 = smul.addr %s336, 8
        %s338 = scalar_lea.vmem %s0, %s337
        %v340 = vld [vmem:[%s338] sm:$0xff]
        %v341 = vld [vmem:[%s1] sm:$0x1]
        %v342 = vld [vmem:[%s2] sm:$0x1]
        %vm343 = vcmask 261120
        %v344 = vsel %vm343, %v340, 0.0
        %345 = vadd.xlane.f32.xlu0 %v344
        %v346 = vpop.xlane.xlu0 %345
        %v347 = vrcp.pop 32.0
        %v348 = vmul.f32 %v346, %v347
        %v349 = vsub.f32 %v340, %v348
        %v350 = vmul.f32 %v349, %v349
        %v351 = vsel %vm343, %v350, 0.0
        %352 = vadd.xlane.f32.xlu0 %v351
        %v353 = vpop.xlane.xlu0 %352
        %v354 = vmul.f32 %v353, %v347
        %v355 = vadd.f32 %v354, 1e-05
        %v356 = vrsqrt.pop %v355
        %v357 = vmul.f32 %v349, %v356
        %v359 = vlaneseq
        %v360 = vshrl.u32 %v359, 7
        %v361 = vsub.s32 0, %v360
        %v362 = vrot.slane %v341, %v361
        %v364 = vmul.f32 %v357, %v362
        %v366 = vlaneseq
        %v367 = vshrl.u32 %v366, 7
        %v368 = vsub.s32 0, %v367
        %v369 = vrot.slane %v342, %v368
        %v371 = vadd.f32 %v364, %v369
        %v372 = vpack.c.bf16 %v371, %v371
        %v373 = vld [vmem:[%s3] sm:$0xf]
        %v374 = vld [vmem:[%s3 + $0x4] sm:$0xf]
        %v375 = vld [vmem:[%s3 + $0x8] sm:$0xf]
        %v376 = vld [vmem:[%s3 + $0xc] sm:$0xf]
        %v377 = vld [vmem:[%s3 + $0x10] sm:$0xf]
        %v378 = vld [vmem:[%s3 + $0x14] sm:$0xf]
        %v379 = vld [vmem:[%s3 + $0x18] sm:$0xf]
        %v380 = vld [vmem:[%s3 + $0x1c] sm:$0xf]
        %v381 = vld [vmem:[%s3 + $0x20] sm:$0xf]
        %v382 = vld [vmem:[%s3 + $0x24] sm:$0xf]
        %v383 = vld [vmem:[%s3 + $0x28] sm:$0xf]
        %v384 = vld [vmem:[%s3 + $0x2c] sm:$0xf]
        %v385 = vld [vmem:[%s3 + $0x30] sm:$0xf]
        %v386 = vld [vmem:[%s3 + $0x34] sm:$0xf]
        %v387 = vld [vmem:[%s3 + $0x38] sm:$0xf]
        %v388 = vld [vmem:[%s3 + $0x3c] sm:$0xf]
        %v389 = vld [vmem:[%s4] sm:$0x1]
        %v390 = vld [vmem:[%s4 + $0x1] sm:$0x1]
        %v391 = vld [vmem:[%s4 + $0x2] sm:$0x1]
        %v392 = vld [vmem:[%s4 + $0x3] sm:$0x1]
        %v397 = vlaneseq
        %v398 = vshrl.u32 %v397, 7
        %v399 = vsub.s32 0, %v398
        %v400 = vrot.slane %v389, %v399
        %v401 = vlaneseq
        %v402 = vshrl.u32 %v401, 7
        %v403 = vsub.s32 0, %v402
        %v404 = vrot.slane %v390, %v403
        %v405 = vlaneseq
        %v406 = vshrl.u32 %v405, 7
        %v407 = vsub.s32 0, %v406
        %v408 = vrot.slane %v391, %v407
        %v409 = vlaneseq
        %v410 = vshrl.u32 %v409, 7
        %v411 = vsub.s32 0, %v410
        %v412 = vrot.slane %v392, %v411
        %v421 = vunpack.c.l.b16 %v373
        %v422 = vunpack.c.l.b16 %v374
        %v423 = vunpack.c.l.b16 %v375
        %v424 = vunpack.c.l.b16 %v376
        %v425 = vpack.c.b16 %v422, %v421
        %v426 = vpack.c.b16 %v424, %v423
        %v430 = vsel %vm343, %v372, 0
        %432 = vmatprep.subr.bf16.mxu0 0
        %433 = vmatpush1.bf16.msra.mxu0 %v425
        %434 = vmatprep.subr.bf16.mxu0 0
        %435 = vmatpush1.bf16.msra.mxu0 %v426
        %436 = vmatprep.subr.bf16.mxu0 0
        %437 = vmatpush1.bf16.msra.mxu0 0
        %438 = vmatprep.subr.bf16.mxu0 0
        %439 = vmatpush1.bf16.msra.mxu0 0
        %440 = vmatprep.subr.bf16.mxu0 0
        %441 = vmatpush1.bf16.msra.mxu0 0
        %442 = vmatprep.subr.bf16.mxu0 0
        %443 = vmatpush1.bf16.msra.mxu0 0
        %444 = vmatprep.subr.bf16.mxu0 0
        %445 = vmatpush1.bf16.msra.mxu0 0
        %446 = vmatprep.subr.bf16.mxu0 0
        %447 = vmatpush1.bf16.msra.mxu0 0
        %448 = vmatprep.subr.bf16.mxu0 0
        %449 = vmatpush1.bf16.msra.mxu0 0
        %450 = vmatprep.subr.bf16.mxu0 0
        %451 = vmatpush1.bf16.msra.mxu0 0
        %452 = vmatprep.subr.bf16.mxu0 0
        %453 = vmatpush1.bf16.msra.mxu0 0
        %454 = vmatprep.subr.bf16.mxu0 0
        %455 = vmatpush1.bf16.msra.mxu0 0
        %456 = vmatprep.subr.bf16.mxu0 0
        %457 = vmatpush1.bf16.msra.mxu0 0
        %458 = vmatprep.subr.bf16.mxu0 0
        %459 = vmatpush1.bf16.msra.mxu0 0
        %460 = vmatprep.subr.bf16.mxu0 0
        %461 = vmatpush1.bf16.msra.mxu0 0
        %462 = vmatprep.subr.bf16.mxu0 0
        %463 = vmatpush1.bf16.msra.mxu0 0
        %464 = vmatprep.mubr.bf16.mxu0 0
        %465 = vmatmul.mubr.bf16.gmra.mrb[0].mxu0 %v430
        %v466 = vpop.f32.mrb[0].mxu0
        %v467 = vadd.f32 %v400, %v466
        %v468 = vpop.f32.mrb[0].mxu0
        %v469 = vpop.f32.mrb[0].mxu0
        %v470 = vpop.f32.mrb[0].mxu0
        %471 = vdwg.mxu0
        %v476 = vunpack.c.l.b16 %v377
        %v477 = vunpack.c.l.b16 %v378
        %v478 = vunpack.c.l.b16 %v379
        %v479 = vunpack.c.l.b16 %v380
        %v480 = vpack.c.b16 %v477, %v476
        %v481 = vpack.c.b16 %v479, %v478
        %484 = vmatprep.subr.bf16.mxu0 0
        %485 = vmatpush1.bf16.msra.mxu0 %v480
        %486 = vmatprep.subr.bf16.mxu0 0
        %487 = vmatpush1.bf16.msra.mxu0 %v481
        %488 = vmatprep.subr.bf16.mxu0 0
        %489 = vmatpush1.bf16.msra.mxu0 0
        %490 = vmatprep.subr.bf16.mxu0 0
        %491 = vmatpush1.bf16.msra.mxu0 0
        %492 = vmatprep.subr.bf16.mxu0 0
        %493 = vmatpush1.bf16.msra.mxu0 0
        %494 = vmatprep.subr.bf16.mxu0 0
        %495 = vmatpush1.bf16.msra.mxu0 0
        %496 = vmatprep.subr.bf16.mxu0 0
        %497 = vmatpush1.bf16.msra.mxu0 0
        %498 = vmatprep.subr.bf16.mxu0 0
        %499 = vmatpush1.bf16.msra.mxu0 0
        %500 = vmatprep.subr.bf16.mxu0 0
        %501 = vmatpush1.bf16.msra.mxu0 0
        %502 = vmatprep.subr.bf16.mxu0 0
        %503 = vmatpush1.bf16.msra.mxu0 0
        %504 = vmatprep.subr.bf16.mxu0 0
        %505 = vmatpush1.bf16.msra.mxu0 0
        %506 = vmatprep.subr.bf16.mxu0 0
        %507 = vmatpush1.bf16.msra.mxu0 0
        %508 = vmatprep.subr.bf16.mxu0 0
        %509 = vmatpush1.bf16.msra.mxu0 0
        %510 = vmatprep.subr.bf16.mxu0 0
        %511 = vmatpush1.bf16.msra.mxu0 0
        %512 = vmatprep.subr.bf16.mxu0 0
        %513 = vmatpush1.bf16.msra.mxu0 0
        %514 = vmatprep.subr.bf16.mxu0 0
        %515 = vmatpush1.bf16.msra.mxu0 0
        %516 = vmatprep.mubr.bf16.mxu0 0
        %517 = vmatmul.mubr.bf16.gmra.mrb[0].mxu0 %v430
        %v518 = vpop.f32.mrb[0].mxu0
        %v519 = vadd.f32 %v404, %v518
        %v520 = vpop.f32.mrb[0].mxu0
        %v521 = vpop.f32.mrb[0].mxu0
        %v522 = vpop.f32.mrb[0].mxu0
        %523 = vdwg.mxu0
        %v528 = vunpack.c.l.b16 %v381
        %v529 = vunpack.c.l.b16 %v382
        %v530 = vunpack.c.l.b16 %v383
        %v531 = vunpack.c.l.b16 %v384
        %v532 = vpack.c.b16 %v529, %v528
        %v533 = vpack.c.b16 %v531, %v530
        %536 = vmatprep.subr.bf16.mxu0 0
        %537 = vmatpush1.bf16.msra.mxu0 %v532
        %538 = vmatprep.subr.bf16.mxu0 0
        %539 = vmatpush1.bf16.msra.mxu0 %v533
        %540 = vmatprep.subr.bf16.mxu0 0
        %541 = vmatpush1.bf16.msra.mxu0 0
        %542 = vmatprep.subr.bf16.mxu0 0
        %543 = vmatpush1.bf16.msra.mxu0 0
        %544 = vmatprep.subr.bf16.mxu0 0
        %545 = vmatpush1.bf16.msra.mxu0 0
        %546 = vmatprep.subr.bf16.mxu0 0
        %547 = vmatpush1.bf16.msra.mxu0 0
        %548 = vmatprep.subr.bf16.mxu0 0
        %549 = vmatpush1.bf16.msra.mxu0 0
        %550 = vmatprep.subr.bf16.mxu0 0
        %551 = vmatpush1.bf16.msra.mxu0 0
        %552 = vmatprep.subr.bf16.mxu0 0
        %553 = vmatpush1.bf16.msra.mxu0 0
        %554 = vmatprep.subr.bf16.mxu0 0
        %555 = vmatpush1.bf16.msra.mxu0 0
        %556 = vmatprep.subr.bf16.mxu0 0
        %557 = vmatpush1.bf16.msra.mxu0 0
        %558 = vmatprep.subr.bf16.mxu0 0
        %559 = vmatpush1.bf16.msra.mxu0 0
        %560 = vmatprep.subr.bf16.mxu0 0
        %561 = vmatpush1.bf16.msra.mxu0 0
        %562 = vmatprep.subr.bf16.mxu0 0
        %563 = vmatpush1.bf16.msra.mxu0 0
        %564 = vmatprep.subr.bf16.mxu0 0
        %565 = vmatpush1.bf16.msra.mxu0 0
        %566 = vmatprep.subr.bf16.mxu0 0
        %567 = vmatpush1.bf16.msra.mxu0 0
        %568 = vmatprep.mubr.bf16.mxu0 0
        %569 = vmatmul.mubr.bf16.gmra.mrb[0].mxu0 %v430
        %v570 = vpop.f32.mrb[0].mxu0
        %v571 = vadd.f32 %v408, %v570
        %v572 = vpop.f32.mrb[0].mxu0
        %v573 = vpop.f32.mrb[0].mxu0
        %v574 = vpop.f32.mrb[0].mxu0
        %575 = vdwg.mxu0
        %v580 = vunpack.c.l.b16 %v385
        %v581 = vunpack.c.l.b16 %v386
        %v582 = vunpack.c.l.b16 %v387
        %v583 = vunpack.c.l.b16 %v388
        %v584 = vpack.c.b16 %v581, %v580
        %v585 = vpack.c.b16 %v583, %v582
        %588 = vmatprep.subr.bf16.mxu0 0
        %589 = vmatpush1.bf16.msra.mxu0 %v584
        %590 = vmatprep.subr.bf16.mxu0 0
        %591 = vmatpush1.bf16.msra.mxu0 %v585
        %592 = vmatprep.subr.bf16.mxu0 0
        %593 = vmatpush1.bf16.msra.mxu0 0
        %594 = vmatprep.subr.bf16.mxu0 0
        %595 = vmatpush1.bf16.msra.mxu0 0
        %596 = vmatprep.subr.bf16.mxu0 0
        %597 = vmatpush1.bf16.msra.mxu0 0
        %598 = vmatprep.subr.bf16.mxu0 0
        %599 = vmatpush1.bf16.msra.mxu0 0
        %600 = vmatprep.subr.bf16.mxu0 0
        %601 = vmatpush1.bf16.msra.mxu0 0
        %602 = vmatprep.subr.bf16.mxu0 0
        %603 = vmatpush1.bf16.msra.mxu0 0
        %604 = vmatprep.subr.bf16.mxu0 0
        %605 = vmatpush1.bf16.msra.mxu0 0
        %606 = vmatprep.subr.bf16.mxu0 0
        %607 = vmatpush1.bf16.msra.mxu0 0
        %608 = vmatprep.subr.bf16.mxu0 0
        %609 = vmatpush1.bf16.msra.mxu0 0
        %610 = vmatprep.subr.bf16.mxu0 0
        %611 = vmatpush1.bf16.msra.mxu0 0
        %612 = vmatprep.subr.bf16.mxu0 0
        %613 = vmatpush1.bf16.msra.mxu0 0
        %614 = vmatprep.subr.bf16.mxu0 0
        %615 = vmatpush1.bf16.msra.mxu0 0
        %616 = vmatprep.subr.bf16.mxu0 0
        %617 = vmatpush1.bf16.msra.mxu0 0
        %618 = vmatprep.subr.bf16.mxu0 0
        %619 = vmatpush1.bf16.msra.mxu0 0
        %620 = vmatprep.mubr.bf16.mxu0 0
        %621 = vmatmul.mubr.bf16.gmra.mrb[0].mxu0 %v430
        %v622 = vpop.f32.mrb[0].mxu0
        %v623 = vadd.f32 %v412, %v622
        %v624 = vpop.f32.mrb[0].mxu0
        %v625 = vpop.f32.mrb[0].mxu0
        %v626 = vpop.f32.mrb[0].mxu0
        %627 = vdwg.mxu0
        %v628 = vld [vmem:[%s5] sm:$0xf]
        %v629 = vld [vmem:[%s5 + $0x4] sm:$0xf]
        %v630 = vld [vmem:[%s5 + $0x8] sm:$0xf]
        %v631 = vld [vmem:[%s5 + $0xc] sm:$0xf]
        %v632 = vld [vmem:[%s5 + $0x10] sm:$0xf]
        %v633 = vld [vmem:[%s5 + $0x14] sm:$0xf]
        %v634 = vld [vmem:[%s5 + $0x18] sm:$0xf]
        %v635 = vld [vmem:[%s5 + $0x1c] sm:$0xf]
        %v636 = vld [vmem:[%s5 + $0x20] sm:$0xf]
        %v637 = vld [vmem:[%s5 + $0x24] sm:$0xf]
        %v638 = vld [vmem:[%s5 + $0x28] sm:$0xf]
        %v639 = vld [vmem:[%s5 + $0x2c] sm:$0xf]
        %v640 = vld [vmem:[%s5 + $0x30] sm:$0xf]
        %v641 = vld [vmem:[%s5 + $0x34] sm:$0xf]
        %v642 = vld [vmem:[%s5 + $0x38] sm:$0xf]
        %v643 = vld [vmem:[%s5 + $0x3c] sm:$0xf]
        %v644 = vld [vmem:[%s6] sm:$0x1]
        %v645 = vld [vmem:[%s6 + $0x1] sm:$0x1]
        %v646 = vld [vmem:[%s6 + $0x2] sm:$0x1]
        %v647 = vld [vmem:[%s6 + $0x3] sm:$0x1]
        %v652 = vlaneseq
        %v653 = vshrl.u32 %v652, 7
        %v654 = vsub.s32 0, %v653
        %v655 = vrot.slane %v644, %v654
        %v656 = vlaneseq
        %v657 = vshrl.u32 %v656, 7
        %v658 = vsub.s32 0, %v657
        %v659 = vrot.slane %v645, %v658
        %v660 = vlaneseq
        %v661 = vshrl.u32 %v660, 7
        %v662 = vsub.s32 0, %v661
        %v663 = vrot.slane %v646, %v662
        %v664 = vlaneseq
        %v665 = vshrl.u32 %v664, 7
        %v666 = vsub.s32 0, %v665
        %v667 = vrot.slane %v647, %v666
        %v676 = vunpack.c.l.b16 %v628
        %v677 = vunpack.c.l.b16 %v629
        %v678 = vunpack.c.l.b16 %v630
        %v679 = vunpack.c.l.b16 %v631
        %v680 = vpack.c.b16 %v677, %v676
        %v681 = vpack.c.b16 %v679, %v678
        %684 = vmatprep.subr.bf16.mxu0 0
        %685 = vmatpush1.bf16.msra.mxu0 %v680
        %686 = vmatprep.subr.bf16.mxu0 0
        %687 = vmatpush1.bf16.msra.mxu0 %v681
        %688 = vmatprep.subr.bf16.mxu0 0
        %689 = vmatpush1.bf16.msra.mxu0 0
        %690 = vmatprep.subr.bf16.mxu0 0
        %691 = vmatpush1.bf16.msra.mxu0 0
        %692 = vmatprep.subr.bf16.mxu0 0
        %693 = vmatpush1.bf16.msra.mxu0 0
        %694 = vmatprep.subr.bf16.mxu0 0
        %695 = vmatpush1.bf16.msra.mxu0 0
        %696 = vmatprep.subr.bf16.mxu0 0
        %697 = vmatpush1.bf16.msra.mxu0 0
        %698 = vmatprep.subr.bf16.mxu0 0
        %699 = vmatpush1.bf16.msra.mxu0 0
        %700 = vmatprep.subr.bf16.mxu0 0
        %701 = vmatpush1.bf16.msra.mxu0 0
        %702 = vmatprep.subr.bf16.mxu0 0
        %703 = vmatpush1.bf16.msra.mxu0 0
        %704 = vmatprep.subr.bf16.mxu0 0
        %705 = vmatpush1.bf16.msra.mxu0 0
        %706 = vmatprep.subr.bf16.mxu0 0
        %707 = vmatpush1.bf16.msra.mxu0 0
        %708 = vmatprep.subr.bf16.mxu0 0
        %709 = vmatpush1.bf16.msra.mxu0 0
        %710 = vmatprep.subr.bf16.mxu0 0
        %711 = vmatpush1.bf16.msra.mxu0 0
        %712 = vmatprep.subr.bf16.mxu0 0
        %713 = vmatpush1.bf16.msra.mxu0 0
        %714 = vmatprep.subr.bf16.mxu0 0
        %715 = vmatpush1.bf16.msra.mxu0 0
        %716 = vmatprep.mubr.bf16.mxu0 0
        %717 = vmatmul.mubr.bf16.gmra.mrb[0].mxu0 %v430
        %v718 = vpop.f32.mrb[0].mxu0
        %v719 = vadd.f32 %v655, %v718
        %v720 = vpop.f32.mrb[0].mxu0
        %v721 = vpop.f32.mrb[0].mxu0
        %v722 = vpop.f32.mrb[0].mxu0
        %723 = vdwg.mxu0
        %v728 = vunpack.c.l.b16 %v632
        %v729 = vunpack.c.l.b16 %v633
        %v730 = vunpack.c.l.b16 %v634
        %v731 = vunpack.c.l.b16 %v635
        %v732 = vpack.c.b16 %v729, %v728
        %v733 = vpack.c.b16 %v731, %v730
        %736 = vmatprep.subr.bf16.mxu0 0
        %737 = vmatpush1.bf16.msra.mxu0 %v732
        %738 = vmatprep.subr.bf16.mxu0 0
        %739 = vmatpush1.bf16.msra.mxu0 %v733
        %740 = vmatprep.subr.bf16.mxu0 0
        %741 = vmatpush1.bf16.msra.mxu0 0
        %742 = vmatprep.subr.bf16.mxu0 0
        %743 = vmatpush1.bf16.msra.mxu0 0
        %744 = vmatprep.subr.bf16.mxu0 0
        %745 = vmatpush1.bf16.msra.mxu0 0
        %746 = vmatprep.subr.bf16.mxu0 0
        %747 = vmatpush1.bf16.msra.mxu0 0
        %748 = vmatprep.subr.bf16.mxu0 0
        %749 = vmatpush1.bf16.msra.mxu0 0
        %750 = vmatprep.subr.bf16.mxu0 0
        %751 = vmatpush1.bf16.msra.mxu0 0
        %752 = vmatprep.subr.bf16.mxu0 0
        %753 = vmatpush1.bf16.msra.mxu0 0
        %754 = vmatprep.subr.bf16.mxu0 0
        %755 = vmatpush1.bf16.msra.mxu0 0
        %756 = vmatprep.subr.bf16.mxu0 0
        %757 = vmatpush1.bf16.msra.mxu0 0
        %758 = vmatprep.subr.bf16.mxu0 0
        %759 = vmatpush1.bf16.msra.mxu0 0
        %760 = vmatprep.subr.bf16.mxu0 0
        %761 = vmatpush1.bf16.msra.mxu0 0
        %762 = vmatprep.subr.bf16.mxu0 0
        %763 = vmatpush1.bf16.msra.mxu0 0
        %764 = vmatprep.subr.bf16.mxu0 0
        %765 = vmatpush1.bf16.msra.mxu0 0
        %766 = vmatprep.subr.bf16.mxu0 0
        %767 = vmatpush1.bf16.msra.mxu0 0
        %768 = vmatprep.mubr.bf16.mxu0 0
        %769 = vmatmul.mubr.bf16.gmra.mrb[0].mxu0 %v430
        %v770 = vpop.f32.mrb[0].mxu0
        %v771 = vadd.f32 %v659, %v770
        %v772 = vpop.f32.mrb[0].mxu0
        %v773 = vpop.f32.mrb[0].mxu0
        %v774 = vpop.f32.mrb[0].mxu0
        %775 = vdwg.mxu0
        %v780 = vunpack.c.l.b16 %v636
        %v781 = vunpack.c.l.b16 %v637
        %v782 = vunpack.c.l.b16 %v638
        %v783 = vunpack.c.l.b16 %v639
        %v784 = vpack.c.b16 %v781, %v780
        %v785 = vpack.c.b16 %v783, %v782
        %788 = vmatprep.subr.bf16.mxu0 0
        %789 = vmatpush1.bf16.msra.mxu0 %v784
        %790 = vmatprep.subr.bf16.mxu0 0
        %791 = vmatpush1.bf16.msra.mxu0 %v785
        %792 = vmatprep.subr.bf16.mxu0 0
        %793 = vmatpush1.bf16.msra.mxu0 0
        %794 = vmatprep.subr.bf16.mxu0 0
        %795 = vmatpush1.bf16.msra.mxu0 0
        %796 = vmatprep.subr.bf16.mxu0 0
        %797 = vmatpush1.bf16.msra.mxu0 0
        %798 = vmatprep.subr.bf16.mxu0 0
        %799 = vmatpush1.bf16.msra.mxu0 0
        %800 = vmatprep.subr.bf16.mxu0 0
        %801 = vmatpush1.bf16.msra.mxu0 0
        %802 = vmatprep.subr.bf16.mxu0 0
        %803 = vmatpush1.bf16.msra.mxu0 0
        %804 = vmatprep.subr.bf16.mxu0 0
        %805 = vmatpush1.bf16.msra.mxu0 0
        %806 = vmatprep.subr.bf16.mxu0 0
        %807 = vmatpush1.bf16.msra.mxu0 0
        %808 = vmatprep.subr.bf16.mxu0 0
        %809 = vmatpush1.bf16.msra.mxu0 0
        %810 = vmatprep.subr.bf16.mxu0 0
        %811 = vmatpush1.bf16.msra.mxu0 0
        %812 = vmatprep.subr.bf16.mxu0 0
        %813 = vmatpush1.bf16.msra.mxu0 0
        %814 = vmatprep.subr.bf16.mxu0 0
        %815 = vmatpush1.bf16.msra.mxu0 0
        %816 = vmatprep.subr.bf16.mxu0 0
        %817 = vmatpush1.bf16.msra.mxu0 0
        %818 = vmatprep.subr.bf16.mxu0 0
        %819 = vmatpush1.bf16.msra.mxu0 0
        %820 = vmatprep.mubr.bf16.mxu0 0
        %821 = vmatmul.mubr.bf16.gmra.mrb[0].mxu0 %v430
        %v822 = vpop.f32.mrb[0].mxu0
        %v823 = vadd.f32 %v663, %v822
        %v824 = vpop.f32.mrb[0].mxu0
        %v825 = vpop.f32.mrb[0].mxu0
        %v826 = vpop.f32.mrb[0].mxu0
        %827 = vdwg.mxu0
        %v832 = vunpack.c.l.b16 %v640
        %v833 = vunpack.c.l.b16 %v641
        %v834 = vunpack.c.l.b16 %v642
        %v835 = vunpack.c.l.b16 %v643
        %v836 = vpack.c.b16 %v833, %v832
        %v837 = vpack.c.b16 %v835, %v834
        %840 = vmatprep.subr.bf16.mxu0 0
        %841 = vmatpush1.bf16.msra.mxu0 %v836
        %842 = vmatprep.subr.bf16.mxu0 0
        %843 = vmatpush1.bf16.msra.mxu0 %v837
        %844 = vmatprep.subr.bf16.mxu0 0
        %845 = vmatpush1.bf16.msra.mxu0 0
        %846 = vmatprep.subr.bf16.mxu0 0
        %847 = vmatpush1.bf16.msra.mxu0 0
        %848 = vmatprep.subr.bf16.mxu0 0
        %849 = vmatpush1.bf16.msra.mxu0 0
        %850 = vmatprep.subr.bf16.mxu0 0
        %851 = vmatpush1.bf16.msra.mxu0 0
        %852 = vmatprep.subr.bf16.mxu0 0
        %853 = vmatpush1.bf16.msra.mxu0 0
        %854 = vmatprep.subr.bf16.mxu0 0
        %855 = vmatpush1.bf16.msra.mxu0 0
        %856 = vmatprep.subr.bf16.mxu0 0
        %857 = vmatpush1.bf16.msra.mxu0 0
        %858 = vmatprep.subr.bf16.mxu0 0
        %859 = vmatpush1.bf16.msra.mxu0 0
        %860 = vmatprep.subr.bf16.mxu0 0
        %861 = vmatpush1.bf16.msra.mxu0 0
        %862 = vmatprep.subr.bf16.mxu0 0
        %863 = vmatpush1.bf16.msra.mxu0 0
        %864 = vmatprep.subr.bf16.mxu0 0
        %865 = vmatpush1.bf16.msra.mxu0 0
        %866 = vmatprep.subr.bf16.mxu0 0
        %867 = vmatpush1.bf16.msra.mxu0 0
        %868 = vmatprep.subr.bf16.mxu0 0
        %869 = vmatpush1.bf16.msra.mxu0 0
        %870 = vmatprep.subr.bf16.mxu0 0
        %871 = vmatpush1.bf16.msra.mxu0 0
        %872 = vmatprep.mubr.bf16.mxu0 0
        %873 = vmatmul.mubr.bf16.gmra.mrb[0].mxu0 %v430
        %v874 = vpop.f32.mrb[0].mxu0
        %v875 = vadd.f32 %v667, %v874
        %v876 = vpop.f32.mrb[0].mxu0
        %v877 = vpop.f32.mrb[0].mxu0
        %v878 = vpop.f32.mrb[0].mxu0
        %879 = vdwg.mxu0
        %v880 = vpack.c.bf16 %v467, %v467
        %v881 = vpack.c.bf16 %v519, %v519
        %v882 = vpack.c.bf16 %v571, %v571
        %v883 = vpack.c.bf16 %v623, %v623
        %vm884 = vcmask 60416
        %885 = vst.msk [vmem:[%s324] sm:$0xf] %vm884, %v880
        %886 = vst.msk [vmem:[%s324 + $0x4] sm:$0xf] %vm884, %v881
        %887 = vst.msk [vmem:[%s324 + $0x8] sm:$0xf] %vm884, %v882
        %888 = vst.msk [vmem:[%s324 + $0xc] sm:$0xf] %vm884, %v883
        %v889 = vpack.c.bf16 %v719, %v719
        %v890 = vpack.c.bf16 %v771, %v771
        %v891 = vpack.c.bf16 %v823, %v823
        %v892 = vpack.c.bf16 %v875, %v875
        %893 = vst.msk [vmem:[%s331] sm:$0xf] %vm884, %v889
        %894 = vst.msk [vmem:[%s331 + $0x4] sm:$0xf] %vm884, %v890
        %895 = vst.msk [vmem:[%s331 + $0x8] sm:$0xf] %vm884, %v891
        %896 = vst.msk [vmem:[%s331 + $0xc] sm:$0xf] %vm884, %v892
        %s897 = sand.u32 %s202, 1
        %s898 = scalar_lea.sflag [#allocation3], %s897
        %s899 = sand.u32 %s202, 1
        %s900 = smul.addr %s899, 16
        %s901 = scalar_lea.vmem [#allocation2], %s900
        %s902 = sand.u32 %s230, 1
        %s903 = scalar_lea.sflag [#allocation5], %s902
        %s904 = sand.u32 %s230, 1
        %s905 = smul.addr %s904, 16
        %s906 = scalar_lea.vmem [#allocation4], %s905
        // Predicated region
        $region49: #{tpu_custom_call.1} parent=47 // pred_check
          %p907 = pneg %p212
        $region50: #{tpu_custom_call.1} parent=47 // pred_check_branch
          %909 = sbr.rel (%p907) target = $region52
        $region51: #{tpu_custom_call.1} parent=47 // pred_region
          %s911 = ssub.s32 256, 256
          %912 = vsyncadd %s898, %s911
          %s913 = smul.addr %s30, 4
          %s914 = sadd.s32 %s31, %s913
          %s915 = smul.addr %s914, 64
          %s916 = scalar_lea.hbm %s7, %s915
          %s917 = sshll.u32 %s901, 4
          %s918 = int_to_ptr.vmem [resolvable:$true] %s917
          %923 = dma.vmem_to_hbm [thread:$0]  %s918, 256, %s916, %s898, 64, 64, 4
        $region52: #{tpu_custom_call.1} parent=47 // pred_fallthru
          _
        // Predicated region
        $region53: #{tpu_custom_call.1} parent=47 // pred_check
          %p924 = pneg %p240
        $region54: #{tpu_custom_call.1} parent=47 // pred_check_branch
          %926 = sbr.rel (%p924) target = $region56
        $region55: #{tpu_custom_call.1} parent=47 // pred_region
          %s928 = ssub.s32 256, 256
          %929 = vsyncadd %s903, %s928
          %s930 = smul.addr %s30, 4
          %s931 = sadd.s32 %s31, %s930
          %s932 = smul.addr %s931, 64
          %s933 = scalar_lea.hbm %s8, %s932
          %s934 = sshll.u32 %s906, 4
          %s935 = int_to_ptr.vmem [resolvable:$true] %s934
          %940 = dma.vmem_to_hbm [thread:$0]  %s935, 256, %s933, %s903, 64, 64, 4
        $region56: #{tpu_custom_call.1} parent=47 // pred_fallthru
          _
      $region48: #{tpu_custom_call.1} parent=5 // pred_fallthru
        _
      %p941 = scmp.le.s32.totalorder 2, %s21
      // Predicated region
      $region57: #{tpu_custom_call.1} parent=5 // pred_check
        %p942 = pneg %p941
      $region58: #{tpu_custom_call.1} parent=5 // pred_check_branch
        %944 = sbr.rel (%p942) target = $region60
      $region59: #{tpu_custom_call.1} parent=5 // pred_region
        %s945 = ssub.s32 %s21, 2
        // Predicated region
        $region61: #{tpu_custom_call.1} parent=59 // pred_check
          %p946 = pneg %p218
        $region62: #{tpu_custom_call.1} parent=59 // pred_check_branch
          %948 = sbr.rel (%p946) target = $region64
        $region63: #{tpu_custom_call.1} parent=59 // pred_region
          %s949 = sand.u32 %s203, 1
          %s950 = scalar_lea.sflag [#allocation3], %s949
          %s951 = sand.u32 %s203, 1
          %s952 = smul.addr %s951, 16
          %s953 = scalar_lea.vmem [#allocation2], %s952
          %954 = dma.done %s950, 256
        $region64: #{tpu_custom_call.1} parent=59 // pred_fallthru
          _
        // Predicated region
        $region65: #{tpu_custom_call.1} parent=59 // pred_check
          %p955 = pneg %p246
        $region66: #{tpu_custom_call.1} parent=59 // pred_check_branch
          %957 = sbr.rel (%p955) target = $region68
        $region67: #{tpu_custom_call.1} parent=59 // pred_region
          %s958 = sand.u32 %s231, 1
          %s959 = scalar_lea.sflag [#allocation5], %s958
          %s960 = sand.u32 %s231, 1
          %s961 = smul.addr %s960, 16
          %s962 = scalar_lea.vmem [#allocation4], %s961
          %963 = dma.done %s959, 256
        $region68: #{tpu_custom_call.1} parent=59 // pred_fallthru
          _
      $region60: #{tpu_custom_call.1} parent=5 // pred_fallthru
        _
    $region6: #{tpu_custom_call.1} parent=1 // loop_footer
      %s25 = sadd.s32 1, %s21
    $region7: #{tpu_custom_call.1} parent=1 // loop_footer_branch
      %20 = sbr.rel target = $region3
    $region8: #{tpu_custom_call.1} parent=1 // loop_exit
      _
    %964 = vsyncpa [#allocation3], 1
    %s965 = scalar_lea.sflag [#allocation3], 1
    %966 = vsyncpa %s965, 1
    %967 = vsyncpa [#allocation5], 1
    %s968 = scalar_lea.sflag [#allocation5], 1
    %969 = vsyncpa %s968, 1

</llo_original>
